<compile_context>
chip_gen: v7x
topology: tpu7x:2x2x1
jax: 0.10.0
libtpu: 0.0.40
codegen_flags: <defaults>
</compile_context>

<pallas_src>
import math

import jax
import jax.numpy as jnp
import numpy as np
from jax.experimental import pallas as pl
from jax.experimental.pallas import tpu as pltpu

DEFAULT_TILE_E = 2048   # edge rows per grid step
HID = 64                # hidden width fixed by the module (Linear(in*2, 64), Linear(64, 64))
_INV_SQRT2 = 0.7071067811865476


def _erf(x):
    # Abramowitz & Stegun 7.1.26, max abs err ~1.5e-7.
    # Exact divide (correctness fix): the approx EUP reciprocal was too coarse here.
    a1, a2, a3, a4, a5 = 0.254829592, -0.284496736, 1.421413741, -1.453152027, 1.061405429
    p = 0.3275911
    ax = jnp.abs(x)
    t = 1.0 / (1.0 + p * ax)
    poly = ((((a5 * t + a4) * t + a3) * t + a2) * t + a1) * t
    y = 1.0 - poly * jnp.exp(-(ax * ax))
    return jnp.where(x >= 0.0, y, -y)


def _gelu_from_scaled(s):
    # s = z / sqrt(2)  ->  GELU(z) = 0.5*z*(1 + erf(z/sqrt(2))) = (sqrt(2)/2)*s*(1 + erf(s))
    # (the 1/sqrt(2) is folded into the per-node projection outside the kernel)
    return _INV_SQRT2 * s * (1.0 + _erf(s))


def _mlp_edge_kernel(s_ref, w2_ref, wp_ref, feat_ref, score_ref):
    # s_ref: (tile_e, 64) = (x @ W1)/sqrt(2)   w2_ref: (64, 64)   wp_ref: (64, C)
    # feat_ref: (tile_e, 64)                   score_ref: (tile_e, C)
    h = _gelu_from_scaled(s_ref[...])
    feat = jnp.dot(h, w2_ref[...], preferred_element_type=jnp.float32)
    feat_ref[...] = feat
    # Same association as torch: score = (GELU(x@W1) @ w2) @ wp
    score_ref[...] = jnp.dot(feat, wp_ref[...], preferred_element_type=jnp.float32)


def mlp_predictor_forward(ufeat, ifeat, src, dst, params, num_factor, tile_e=DEFAULT_TILE_E):
    """Equivalent of MLPPredictor.forward on a bipartite user->movie edge list."""
    E = int(src.shape[0])
    in_units = int(ufeat.shape[1])
    assert in_units % num_factor == 0

    w1 = params["w1"].astype(jnp.float32)   # (2*in_units, 64), x @ W1 convention
    w2 = params["w2"].astype(jnp.float32)   # (64, 64)
    wp = params["wp"].astype(jnp.float32)   # (64, C)
    C = int(wp.shape[1])
    assert w1.shape == (2 * in_units, HID) and w2.shape == (HID, HID)

    # ---- fold the per-factor interleave into W1's rows (tiny, done once) ----
    chunk = in_units // num_factor
    col = jnp.arange(in_units)
    pos_u = (col // chunk) * (2 * chunk) + (col % chunk)   # where h_u col i lands in x
    pos_v = pos_u + chunk                                  # where h_v col i lands in x

    # ---- layer-1 as a per-NODE projection (gather commutes with the linear layer) ----
    # x @ W1 == h_u @ W1[pos_u] + h_v @ W1[pos_v] == (ufeat @ W1u)[src] + (ifeat @ W1v)[dst]
    # GELU's 1/sqrt(2) is folded in here as well.
    pu = (ufeat.astype(jnp.float32) @ w1[pos_u]) * _INV_SQRT2   # (num_users, 64)
    pv = (ifeat.astype(jnp.float32) @ w1[pos_v]) * _INV_SQRT2   # (num_movies, 64)

    # Single fused XLA gather/gather/add -> the only per-edge HBM intermediate, (E, 64) f32.
    s = pu[src.astype(jnp.int32)] + pv[dst.astype(jnp.int32)]   # (E, 64) = (x @ W1)/sqrt(2)

    # ---- edge tiling: no row padding; Pallas masks the ragged last block ----
    tile_e = ((max(8, int(tile_e)) + 7) // 8) * 8
    two_step_cap = max(8, ((pl.cdiv(E, 2) + 7) // 8) * 8)  # keep >= 2 steps for v7x's 2 TCs
    tile_e = min(tile_e, two_step_cap)
    num_steps = pl.cdiv(E, tile_e)

    feat, score = pl.pallas_call(
        _mlp_edge_kernel,
        out_shape=(jax.ShapeDtypeStruct((E, HID), jnp.float32),
                   jax.ShapeDtypeStruct((E, C), jnp.float32)),
        grid_spec=pltpu.PrefetchScalarGridSpec(
            num_scalar_prefetch=0,
            grid=(num_steps,),
            in_specs=[
                pl.BlockSpec((tile_e, HID), lambda i: (i, 0)),   # pre-activation edge tile
                pl.BlockSpec((HID, HID), lambda i: (0, 0)),      # w2 (resident)
                pl.BlockSpec((HID, C), lambda i: (0, 0)),        # wp (resident)
            ],
            out_specs=[
                pl.BlockSpec((tile_e, HID), lambda i: (i, 0)),   # feat
                pl.BlockSpec((tile_e, C), lambda i: (i, 0)),     # score
            ],
        ),
        compiler_params=pltpu.CompilerParams(
            dimension_semantics=("parallel",),          # grid splits across v7x's 2 TCs
            vmem_limit_bytes=32 * 1024 * 1024,          # ~2 MiB live per step; safe on v5e/v6e/v7x
        ),
    )(s, w2, wp)

    if num_factor != 1:
        score = jnp.squeeze(score)  # matches torch .squeeze(); no-op for num_classes > 1
    return score, feat


def _reference_forward(ufeat, ifeat, src, dst, params, num_factor):
    """Pure-JAX reference with torch-identical math (exact erf GELU)."""
    h_u = ufeat[src].astype(jnp.float32)
    h_v = ifeat[dst].astype(jnp.float32)
    E, in_units = h_u.shape
    if num_factor == 1:
        x = jnp.concatenate([h_u, h_v], axis=1)
    else:
        chunk = in_units // num_factor
        hu = h_u.reshape(E, num_factor, chunk)
        hv = h_v.reshape(E, num_factor, chunk)
        x = jnp.concatenate([hu, hv], axis=-1).reshape(E, num_factor * 2 * chunk)
    h = jax.nn.gelu(x @ params["w1"], approximate=False)
    feat = h @ params["w2"]
    score = feat @ params["wp"]
    if num_factor != 1:
        score = jnp.squeeze(score)
    return score, feat


def _xavier_uniform(key, fan_in, fan_out):
    bound = math.sqrt(6.0 / (fan_in + fan_out))
    return jax.random.uniform(key, (fan_in, fan_out), jnp.float32, -bound, bound)


def init_params(key, in_units, num_classes):
    k1, k2, k3 = jax.random.split(key, 3)
    return {
        # stored (in, out); PyTorch stores (out, in) -- xavier bound is symmetric so same init law
        "w1": _xavier_uniform(k1, in_units * 2, HID),
        "w2": _xavier_uniform(k2, HID, HID),
        "wp": _xavier_uniform(k3, HID, num_classes),
    }


if __name__ == "__main__":
    in_units = 16
    num_classes = 5
    num_users, num_movies, num_edges = 6, 5, 64

    key = jax.random.PRNGKey(0)
    k_u, k_i, k_s, k_d, k_p = jax.random.split(key, 5)
    ufeat = jax.random.normal(k_u, (num_users, in_units), jnp.float32)
    ifeat = jax.random.normal(k_i, (num_movies, in_units), jnp.float32)
    src = jax.random.randint(k_s, (num_edges,), 0, num_users, dtype=jnp.int32)
    dst = jax.random.randint(k_d, (num_edges,), 0, num_movies, dtype=jnp.int32)
    params = init_params(k_p, in_units, num_classes)

    # (num_factor, tile_e): exercise both factor paths and multi-step grids.
    for num_factor, tile_e in ((2, DEFAULT_TILE_E), (1, DEFAULT_TILE_E), (2, 16)):
        score, feat = mlp_predictor_forward(
            ufeat, ifeat, src, dst, params, num_factor, tile_e=tile_e)
        jax.block_until_ready((score, feat))

        assert score.shape == (num_edges, num_classes)
        assert feat.shape == (num_edges, HID)

        score_ref, feat_ref = _reference_forward(ufeat, ifeat, src, dst, params, num_factor)
        np.testing.assert_allclose(np.asarray(feat), np.asarray(feat_ref), rtol=2e-3, atol=2e-3)
        np.testing.assert_allclose(np.asarray(score), np.asarray(score_ref), rtol=2e-3, atol=2e-3)

    print("KERNEL_OK")
</pallas_src>

<mosaic_0001>
module attributes {stable_mosaic.version = 11 : i64} {
  func.func @_mlp_edge_kernel(%arg0: i32, %arg1: memref<32x64xf32, #tpu.memory_space<vmem>>, %arg2: memref<64x64xf32, #tpu.memory_space<vmem>>, %arg3: memref<64x5xf32, #tpu.memory_space<vmem>>, %arg4: memref<32x64xf32, #tpu.memory_space<vmem>>, %arg5: memref<32x5xf32, #tpu.memory_space<vmem>>) attributes {dimension_semantics = [#tpu.dimension_semantics<parallel>], iteration_bounds = array<i64: 2>, scalar_prefetch = 0 : i64, scratch_operands = 0 : i64, tpu.core_type = #tpu.core_type<tc>, window_params = [{transform_indices = @transform_0, window_bounds = array<i64: 32, 64>}, {pipeline_mode = #tpu.pipeline_mode<synchronous>, transform_indices = @transform_1, window_bounds = array<i64: 64, 64>}, {pipeline_mode = #tpu.pipeline_mode<synchronous>, transform_indices = @transform_2, window_bounds = array<i64: 64, 5>}, {transform_indices = @transform_3, window_bounds = array<i64: 32, 64>}, {transform_indices = @transform_4, window_bounds = array<i64: 32, 5>}]} {
    %c0 = arith.constant 0 : index
    %c0_0 = arith.constant 0 : index
    %0 = vector.load %arg1[%c0, %c0_0] : memref<32x64xf32, #tpu.memory_space<vmem>>, vector<32x64xf32>
    %cst = arith.constant 0.707106769 : f32
    %1 = vector.broadcast %cst : f32 to vector<32x64xf32>
    %2 = arith.mulf %1, %0 : vector<32x64xf32>
    %3 = math.absf %0 : vector<32x64xf32>
    %cst_1 = arith.constant 0.327591091 : f32
    %4 = vector.broadcast %cst_1 : f32 to vector<32x64xf32>
    %5 = arith.mulf %4, %3 : vector<32x64xf32>
    %cst_2 = arith.constant 1.000000e+00 : f32
    %6 = vector.broadcast %cst_2 : f32 to vector<32x64xf32>
    %7 = arith.addf %6, %5 : vector<32x64xf32>
    %cst_3 = arith.constant 1.000000e+00 : f32
    %8 = vector.broadcast %cst_3 : f32 to vector<32x64xf32>
    %9 = arith.divf %8, %7 : vector<32x64xf32>
    %cst_4 = arith.constant 1.06140542 : f32
    %10 = vector.broadcast %cst_4 : f32 to vector<32x64xf32>
    %11 = arith.mulf %10, %9 : vector<32x64xf32>
    %cst_5 = arith.constant -1.45315206 : f32
    %12 = vector.broadcast %cst_5 : f32 to vector<32x64xf32>
    %13 = arith.addf %11, %12 : vector<32x64xf32>
    %14 = arith.mulf %13, %9 : vector<32x64xf32>
    %cst_6 = arith.constant 1.42141378 : f32
    %15 = vector.broadcast %cst_6 : f32 to vector<32x64xf32>
    %16 = arith.addf %14, %15 : vector<32x64xf32>
    %17 = arith.mulf %16, %9 : vector<32x64xf32>
    %cst_7 = arith.constant -0.284496725 : f32
    %18 = vector.broadcast %cst_7 : f32 to vector<32x64xf32>
    %19 = arith.addf %17, %18 : vector<32x64xf32>
    %20 = arith.mulf %19, %9 : vector<32x64xf32>
    %cst_8 = arith.constant 0.254829586 : f32
    %21 = vector.broadcast %cst_8 : f32 to vector<32x64xf32>
    %22 = arith.addf %20, %21 : vector<32x64xf32>
    %23 = arith.mulf %22, %9 : vector<32x64xf32>
    %24 = arith.mulf %3, %3 : vector<32x64xf32>
    %cst_9 = arith.constant 0.000000e+00 : f32
    %25 = vector.broadcast %cst_9 : f32 to vector<32x64xf32>
    %26 = arith.subf %25, %24 : vector<32x64xf32>
    %27 = math.exp %26 : vector<32x64xf32>
    %28 = arith.mulf %23, %27 : vector<32x64xf32>
    %cst_10 = arith.constant 1.000000e+00 : f32
    %29 = vector.broadcast %cst_10 : f32 to vector<32x64xf32>
    %30 = arith.subf %29, %28 : vector<32x64xf32>
    %cst_11 = arith.constant 0.000000e+00 : f32
    %31 = vector.broadcast %cst_11 : f32 to vector<32x64xf32>
    %32 = arith.cmpf oge, %0, %31 : vector<32x64xf32>
    %cst_12 = arith.constant 0.000000e+00 : f32
    %33 = vector.broadcast %cst_12 : f32 to vector<32x64xf32>
    %34 = arith.subf %33, %30 : vector<32x64xf32>
    %35 = arith.select %32, %30, %34 : vector<32x64xi1>, vector<32x64xf32>
    %cst_13 = arith.constant 1.000000e+00 : f32
    %36 = vector.broadcast %cst_13 : f32 to vector<32x64xf32>
    %37 = arith.addf %36, %35 : vector<32x64xf32>
    %38 = arith.mulf %2, %37 : vector<32x64xf32>
    %c0_14 = arith.constant 0 : index
    %c0_15 = arith.constant 0 : index
    %39 = vector.load %arg2[%c0_14, %c0_15] : memref<64x64xf32, #tpu.memory_space<vmem>>, vector<64x64xf32>
    %cst_16 = arith.constant dense<0.000000e+00> : vector<32x64xf32>
    %40 = tpu.matmul %38, %39, %cst_16 {dimension_numbers = #tpu.dot_dimension_numbers<[1], [0], [0], [1], [0, 0, 1, 1], [], []>} : vector<32x64xf32>, vector<64x64xf32>, vector<32x64xf32> -> vector<32x64xf32>
    %c0_17 = arith.constant 0 : index
    %c0_18 = arith.constant 0 : index
    %41 = vector.load %arg4[%c0_17, %c0_18] : memref<32x64xf32, #tpu.memory_space<vmem>>, vector<32x64xf32>
    tpu.vector_store %arg4[%c0_17, %c0_18], %40 {strides = array<i32>} : memref<32x64xf32, #tpu.memory_space<vmem>>, vector<32x64xf32>,
    %c0_19 = arith.constant 0 : index
    %c0_20 = arith.constant 0 : index
    %42 = vector.load %arg3[%c0_19, %c0_20] : memref<64x5xf32, #tpu.memory_space<vmem>>, vector<64x5xf32>
    %cst_21 = arith.constant dense<0.000000e+00> : vector<32x5xf32>
    %43 = tpu.matmul %40, %42, %cst_21 {dimension_numbers = #tpu.dot_dimension_numbers<[1], [0], [0], [1], [0, 0, 1, 1], [], []>} : vector<32x64xf32>, vector<64x5xf32>, vector<32x5xf32> -> vector<32x5xf32>
    %c0_22 = arith.constant 0 : index
    %c0_23 = arith.constant 0 : index
    %44 = vector.load %arg5[%c0_22, %c0_23] : memref<32x5xf32, #tpu.memory_space<vmem>>, vector<32x5xf32>
    tpu.vector_store %arg5[%c0_22, %c0_23], %43 {strides = array<i32>} : memref<32x5xf32, #tpu.memory_space<vmem>>, vector<32x5xf32>,
    return
  }
  func.func @transform_0(%arg0: i32) -> (i32, i32) {
    %c0_i32 = arith.constant 0 : i32
    %c0_i32_0 = arith.constant 0 : i32
    return %arg0, %c0_i32 : i32, i32
  }
  func.func @transform_1(%arg0: i32) -> (i32, i32) {
    %c0_i32 = arith.constant 0 : i32
    %c0_i32_0 = arith.constant 0 : i32
    %c0_i32_1 = arith.constant 0 : i32
    return %c0_i32, %c0_i32_0 : i32, i32
  }
  func.func @transform_2(%arg0: i32) -> (i32, i32) {
    %c0_i32 = arith.constant 0 : i32
    %c0_i32_0 = arith.constant 0 : i32
    %c0_i32_1 = arith.constant 0 : i32
    return %c0_i32, %c0_i32_0 : i32, i32
  }
  func.func @transform_3(%arg0: i32) -> (i32, i32) {
    %c0_i32 = arith.constant 0 : i32
    %c0_i32_0 = arith.constant 0 : i32
    return %arg0, %c0_i32 : i32, i32
  }
  func.func @transform_4(%arg0: i32) -> (i32, i32) {
    %c0_i32 = arith.constant 0 : i32
    %c0_i32_0 = arith.constant 0 : i32
    return %arg0, %c0_i32 : i32, i32
  }
}

</mosaic_0001>

<llo_original>
// kernel: tpu_custom_call.1
$region0: #{tpu_custom_call.1}
  #allocation0 [shape = 'u32[]', space=smem, size = 0x4, offset = 0x4, fixed_abs, tag = 'smem constant byte address 0x4 - core index']
  #allocation1 [shape = 'u32[144,128]{1,0:T(1,128)}', space=vmem, size = 0x12000, scoped, tag = 'internal scratch']
  %s0 = inlined_call_operand.vmem [shape: f32[64,64], index: 0, kind: input, shape index: {}]
  %s1 = inlined_call_operand.hbm [shape: f32[64,64], index: 1, kind: input, shape index: {}]
  %s2 = inlined_call_operand.vmem [shape: f32[64,5], index: 2, kind: input, shape index: {}]
  %s3 = inlined_call_operand.hbm [shape: f32[64,64], index: 3, kind: output, shape index: {0}]
  %s4 = inlined_call_operand.vmem [shape: f32[64,5], index: 4, kind: output, shape index: {1}]
  %5 = xla_tuple %s3, %s4
  %s6 = sld [smem:[#allocation0]]
  $region57: #{tpu_custom_call.1} parent=0
    _
  %s8 = ssub.s32 1, %s6
  %s9 = scalar_select 0, %s8, %s6
  $region1: #{tpu_custom_call.1} parent=0
    #allocation2 [shape = 'u8[32768]{0}', space=vmem, size = 0x8000, scoped, tag = 'input window, operand 1, single buffered']
    #allocation3 [shape = 's32[2]{0}', space=sflag, size = 0x8, scoped, tag = 'scoped memory for tpu_custom_call.1']
    #allocation4 [shape = 's32[2]{0}', space=sflag, size = 0x8, scoped, tag = 'scoped memory for tpu_custom_call.1']
    #allocation5 [shape = 'u8[32768]{0}', space=vmem, size = 0x8000, scoped, tag = 'output window, operand 0']
    %10 = vsyncpa [#allocation3], 0
    %11 = vsyncpa [#allocation4], 0
    %s12 = scalar_lea.sflag [#allocation4], 1
    %13 = vsyncpa %s12, 0
    loop: start=0, step=1, limit=4
    $region2: #{tpu_custom_call.1} parent=1 // loop_pre_header
      _
    $region3: #{tpu_custom_call.1} parent=1 // loop_header
      %s15 = sphi 0, %s19
      %p16 = scmp.ge.s32.totalorder %s15, 4
      %s25 = sphi 0, %s27
      %s28 = sphi 0, %s25
      %s29 = sphi 0, %s28
      %s45 = sphi 0, %s29
      %s49 = sphi 0, %s49
      %s51 = sphi 0, %s49
      %s52 = sphi 0, %s51
      %s66 = sphi 0, %s52
      %s70 = sphi 0, %s70
      %s72 = sphi 0, %s70
      %s73 = sphi 0, %s72
      %s87 = sphi 0, %s73
      %s93 = sphi 0, %s95
      %s96 = sphi 0, %s93
      %s97 = sphi 0, %s96
      %s113 = sphi 0, %s97
      %s119 = sphi 0, %s121
      %s122 = sphi 0, %s119
      %s123 = sphi 0, %s122
      %s139 = sphi 0, %s123
    $region4: #{tpu_custom_call.1} parent=1 // loop_header_branch
      %18 = sbr.rel (%p16) target = $region8
    $region5: #{tpu_custom_call.1} parent=1 // loop_body
      %s20 = ssub.s32 %s15, 1
      %s21 = ssub.s32 %s15, 2
      %s22 = sadd.s32 %s15, 1
      %s23 = ssub.s32 %s15, %s22
      %p24 = scmp.eq.s32.totalorder %s23, 0
      %s26 = sadd.s32 %s25, 1
      %s27 = scalar_select %p24, %s25, %s26
      %p30 = pneg %p24
      %p31 = scmp.eq.s32.totalorder %s15, 1
      %p32 = por %p30, %p31
      %p33 = scmp.ne.s32.totalorder %s25, %s28
      %p34 = scmp.eq.s32.totalorder %s15, 0
      %p35 = por %p33, %p34
      %p36 = scmp.ne.s32.totalorder %s25, %s28
      %p37 = scmp.eq.s32.totalorder %s20, 1
      %p38 = por %p36, %p37
      %p39 = scmp.ne.s32.totalorder %s28, %s29
      %p40 = scmp.eq.s32.totalorder %s20, 0
      %p41 = por %p39, %p40
      %p42 = scmp.ne.s32.totalorder %s28, %s29
      %p43 = scmp.eq.s32.totalorder %s21, 1
      %p44 = por %p42, %p43
      %p46 = scmp.ne.s32.totalorder %s29, %s45
      %p47 = scmp.eq.s32.totalorder %s21, 0
      %p48 = por %p46, %p47
      %s50 = sadd.s32 %s49, 1
      %p53 = scmp.eq.s32.totalorder %s15, 1
      %p54 = scmp.ne.s32.totalorder %s49, %s51
      %p55 = scmp.eq.s32.totalorder %s15, 0
      %p56 = por %p54, %p55
      %p57 = scmp.ne.s32.totalorder %s49, %s51
      %p58 = scmp.eq.s32.totalorder %s20, 1
      %p59 = por %p57, %p58
      %p60 = scmp.ne.s32.totalorder %s51, %s52
      %p61 = scmp.eq.s32.totalorder %s20, 0
      %p62 = por %p60, %p61
      %p63 = scmp.ne.s32.totalorder %s51, %s52
      %p64 = scmp.eq.s32.totalorder %s21, 1
      %p65 = por %p63, %p64
      %p67 = scmp.ne.s32.totalorder %s52, %s66
      %p68 = scmp.eq.s32.totalorder %s21, 0
      %p69 = por %p67, %p68
      %s71 = sadd.s32 %s70, 1
      %p74 = scmp.eq.s32.totalorder %s15, 1
      %p75 = scmp.ne.s32.totalorder %s70, %s72
      %p76 = scmp.eq.s32.totalorder %s15, 0
      %p77 = por %p75, %p76
      %p78 = scmp.ne.s32.totalorder %s70, %s72
      %p79 = scmp.eq.s32.totalorder %s20, 1
      %p80 = por %p78, %p79
      %p81 = scmp.ne.s32.totalorder %s72, %s73
      %p82 = scmp.eq.s32.totalorder %s20, 0
      %p83 = por %p81, %p82
      %p84 = scmp.ne.s32.totalorder %s72, %s73
      %p85 = scmp.eq.s32.totalorder %s21, 1
      %p86 = por %p84, %p85
      %p88 = scmp.ne.s32.totalorder %s73, %s87
      %p89 = scmp.eq.s32.totalorder %s21, 0
      %p90 = por %p88, %p89
      %s91 = ssub.s32 %s15, %s22
      %p92 = scmp.eq.s32.totalorder %s91, 0
      %s94 = sadd.s32 %s93, 1
      %s95 = scalar_select %p92, %s93, %s94
      %p98 = pneg %p92
      %p99 = scmp.eq.s32.totalorder %s15, 1
      %p100 = por %p98, %p99
      %p101 = scmp.ne.s32.totalorder %s93, %s96
      %p102 = scmp.eq.s32.totalorder %s15, 0
      %p103 = por %p101, %p102
      %p104 = scmp.ne.s32.totalorder %s93, %s96
      %p105 = scmp.eq.s32.totalorder %s20, 1
      %p106 = por %p104, %p105
      %p107 = scmp.ne.s32.totalorder %s96, %s97
      %p108 = scmp.eq.s32.totalorder %s20, 0
      %p109 = por %p107, %p108
      %p110 = scmp.ne.s32.totalorder %s96, %s97
      %p111 = scmp.eq.s32.totalorder %s21, 1
      %p112 = por %p110, %p111
      %p114 = scmp.ne.s32.totalorder %s97, %s113
      %p115 = scmp.eq.s32.totalorder %s21, 0
      %p116 = por %p114, %p115
      %s117 = ssub.s32 %s15, %s22
      %p118 = scmp.eq.s32.totalorder %s117, 0
      %s120 = sadd.s32 %s119, 1
      %s121 = scalar_select %p118, %s119, %s120
      %p124 = pneg %p118
      %p125 = scmp.eq.s32.totalorder %s15, 1
      %p126 = por %p124, %p125
      %p127 = scmp.ne.s32.totalorder %s119, %s122
      %p128 = scmp.eq.s32.totalorder %s15, 0
      %p129 = por %p127, %p128
      %p130 = scmp.ne.s32.totalorder %s119, %s122
      %p131 = scmp.eq.s32.totalorder %s20, 1
      %p132 = por %p130, %p131
      %p133 = scmp.ne.s32.totalorder %s122, %s123
      %p134 = scmp.eq.s32.totalorder %s20, 0
      %p135 = por %p133, %p134
      %p136 = scmp.ne.s32.totalorder %s122, %s123
      %p137 = scmp.eq.s32.totalorder %s21, 1
      %p138 = por %p136, %p137
      %p140 = scmp.ne.s32.totalorder %s123, %s139
      %p141 = scmp.eq.s32.totalorder %s21, 0
      %p142 = por %p140, %p141
      %p143 = scmp.le.s32.totalorder 1, %s15
      %p144 = scmp.lt.s32.totalorder %s15, 3
      %p145 = pnand %p143, %p144
      %p146 = pneg %p145
      // Predicated region
      $region9: #{tpu_custom_call.1} parent=5 // pred_check
        _
      $region10: #{tpu_custom_call.1} parent=5 // pred_check_branch
        %148 = sbr.rel (%p145) target = $region12
      $region11: #{tpu_custom_call.1} parent=5 // pred_region
        %s149 = ssub.s32 %s15, 1
        // Predicated region
        $region13: #{tpu_custom_call.1} parent=11 // pred_check
          %p150 = pneg %p62
        $region14: #{tpu_custom_call.1} parent=11 // pred_check_branch
          %152 = sbr.rel (%p150) target = $region16
        $region15: #{tpu_custom_call.1} parent=11 // pred_region
          %s154 = ssub.s32 1024, 1024
          %155 = vsyncadd [#allocation3], %s154
          %s156 = sshll.u32 [#allocation2], 4
          %s157 = int_to_ptr.vmem [resolvable:$true] %s156
          %162 = dma.hbm_to_vmem [thread:$0]  %s1, 1024, %s157, [#allocation3], 128, 128, 8
        $region16: #{tpu_custom_call.1} parent=11 // pred_fallthru
          _
        // Predicated region
        $region17: #{tpu_custom_call.1} parent=11 // pred_check
          %p163 = pneg %p83
        $region18: #{tpu_custom_call.1} parent=11 // pred_check_branch
          %165 = sbr.rel (%p163) target = $region20
        $region19: #{tpu_custom_call.1} parent=11 // pred_region
          _
        $region20: #{tpu_custom_call.1} parent=11 // pred_fallthru
          _
      $region12: #{tpu_custom_call.1} parent=5 // pred_fallthru
        _
      %p166 = scmp.lt.s32.totalorder %s15, 2
      // Predicated region
      $region21: #{tpu_custom_call.1} parent=5 // pred_check
        %p167 = pneg %p166
      $region22: #{tpu_custom_call.1} parent=5 // pred_check_branch
        %169 = sbr.rel (%p167) target = $region24
      $region23: #{tpu_custom_call.1} parent=5 // pred_region
        // Predicated region
        $region25: #{tpu_custom_call.1} parent=23 // pred_check
          %p170 = pneg %p35
        $region26: #{tpu_custom_call.1} parent=23 // pred_check_branch
          %172 = sbr.rel (%p170) target = $region28
        $region27: #{tpu_custom_call.1} parent=23 // pred_region
          %s173 = smul.u32 4, %s15
          %p174 = scmp.lt.s32.totalorder %s173, 7
          %s175 = scalar_select %p174, %s173, 7
          %s176 = smul.addr %s175, 8
          %s177 = scalar_lea.vmem %s0, %s176
          %s178 = smul.u32 4, %s15
        $region28: #{tpu_custom_call.1} parent=23 // pred_fallthru
          _
      $region24: #{tpu_custom_call.1} parent=5 // pred_fallthru
        _
      %p179 = scmp.le.s32.totalorder 1, %s15
      %p180 = scmp.lt.s32.totalorder %s15, 3
      %p181 = pnand %p179, %p180
      %p182 = pneg %p181
      // Predicated region
      $region29: #{tpu_custom_call.1} parent=5 // pred_check
        _
      $region30: #{tpu_custom_call.1} parent=5 // pred_check_branch
        %184 = sbr.rel (%p181) target = $region32
      $region31: #{tpu_custom_call.1} parent=5 // pred_region
        %s185 = ssub.s32 %s15, 1
        // Predicated region
        $region33: #{tpu_custom_call.1} parent=31 // pred_check
          %p186 = pneg %p62
        $region34: #{tpu_custom_call.1} parent=31 // pred_check_branch
          %188 = sbr.rel (%p186) target = $region36
        $region35: #{tpu_custom_call.1} parent=31 // pred_region
          %189 = dma.done [#allocation3], 1024
        $region36: #{tpu_custom_call.1} parent=31 // pred_fallthru
          _
        %s190 = smul.u32 4, %s20
        %p191 = scmp.lt.s32.totalorder %s190, 7
        %s192 = scalar_select %p191, %s190, 7
        %s193 = smul.addr %s192, 8
        %s194 = scalar_lea.vmem %s0, %s193
        %p195 = pneg %p41
        %p196 = pneg %p38
        %p197 = pneg %p62
        %p198 = pneg %p59
        %p199 = pneg %p83
        %p200 = pneg %p80
        %p201 = pneg %p109
        %p202 = pneg %p106
        %s203 = sand.u32 %s96, 1
        %s204 = scalar_lea.sflag [#allocation4], %s203
        %s205 = sand.u32 %s96, 1
        %s206 = smul.addr %s205, 32
        %s207 = scalar_lea.vmem [#allocation5], %s206
        %p208 = pneg %p135
        %p209 = pneg %p132
        %s210 = smul.u32 4, %s20
        %p211 = scmp.lt.s32.totalorder %s210, 7
        %s212 = scalar_select %p211, %s210, 7
        %s213 = smul.addr %s212, 8
        %s214 = scalar_lea.vmem %s4, %s213
        %s215 = smul.u32 4, %s20
        %p216 = scmp.lt.s32.totalorder %s215, 7
        %s217 = scalar_select %p216, %s215, 7
        %s218 = smul.addr %s217, 8
        %s219 = scalar_lea.vmem %s0, %s218
        %s220 = smul.u32 4, %s20
        %s221 = smul.u32 4, %s20
        %s222 = smul.u32 4, %s20
        %p223 = scmp.lt.s32.totalorder %s222, 7
        %s224 = scalar_select %p223, %s222, 7
        %s225 = smul.addr %s224, 8
        %s226 = scalar_lea.vmem %s4, %s225
        %s227 = smul.u32 4, %s20
        %v228 = vld [vmem:[%s219] sm:$0xff]
        %v229 = vld [vmem:[%s219 + $0x8] sm:$0xff]
        %v230 = vld [vmem:[%s219 + $0x10] sm:$0xff]
        %v231 = vld [vmem:[%s219 + $0x18] sm:$0xff]
        %v232 = vmul.f32 %v228, 0.70710677
        %v233 = vmul.f32 %v229, 0.70710677
        %v234 = vmul.f32 %v230, 0.70710677
        %v235 = vmul.f32 %v231, 0.70710677
        %v236 = vand.u32 2147483647, %v228
        %v237 = vand.u32 2147483647, %v229
        %v238 = vand.u32 2147483647, %v230
        %v239 = vand.u32 2147483647, %v231
        %v240 = vmul.f32 %v236, 0.3275911
        %v241 = vmul.f32 %v237, 0.3275911
        %v242 = vmul.f32 %v238, 0.3275911
        %v243 = vmul.f32 %v239, 0.3275911
        %v244 = vadd.f32 %v240, 1.0
        %v245 = vadd.f32 %v241, 1.0
        %v246 = vadd.f32 %v242, 1.0
        %v247 = vadd.f32 %v243, 1.0
        %v248 = vrcp.pop %v244
        %v249 = vmul.f32 1.0, %v248
        %v250 = vrcp.pop %v245
        %v251 = vmul.f32 1.0, %v250
        %v252 = vrcp.pop %v246
        %v253 = vmul.f32 1.0, %v252
        %v254 = vrcp.pop %v247
        %v255 = vmul.f32 1.0, %v254
        %v256 = vmul.f32 %v249, 1.0614054
        %v257 = vmul.f32 %v251, 1.0614054
        %v258 = vmul.f32 %v253, 1.0614054
        %v259 = vmul.f32 %v255, 1.0614054
        %v260 = vadd.f32 %v256, -1.4531521
        %v261 = vadd.f32 %v257, -1.4531521
        %v262 = vadd.f32 %v258, -1.4531521
        %v263 = vadd.f32 %v259, -1.4531521
        %v264 = vmul.f32 %v260, %v249
        %v265 = vmul.f32 %v261, %v251
        %v266 = vmul.f32 %v262, %v253
        %v267 = vmul.f32 %v263, %v255
        %v268 = vadd.f32 %v264, 1.4214138
        %v269 = vadd.f32 %v265, 1.4214138
        %v270 = vadd.f32 %v266, 1.4214138
        %v271 = vadd.f32 %v267, 1.4214138
        %v272 = vmul.f32 %v268, %v249
        %v273 = vmul.f32 %v269, %v251
        %v274 = vmul.f32 %v270, %v253
        %v275 = vmul.f32 %v271, %v255
        %v276 = vadd.f32 %v272, -0.28449672
        %v277 = vadd.f32 %v273, -0.28449672
        %v278 = vadd.f32 %v274, -0.28449672
        %v279 = vadd.f32 %v275, -0.28449672
        %v280 = vmul.f32 %v276, %v249
        %v281 = vmul.f32 %v277, %v251
        %v282 = vmul.f32 %v278, %v253
        %v283 = vmul.f32 %v279, %v255
        %v284 = vadd.f32 %v280, 0.2548296
        %v285 = vadd.f32 %v281, 0.2548296
        %v286 = vadd.f32 %v282, 0.2548296
        %v287 = vadd.f32 %v283, 0.2548296
        %v288 = vmul.f32 %v284, %v249
        %v289 = vmul.f32 %v285, %v251
        %v290 = vmul.f32 %v286, %v253
        %v291 = vmul.f32 %v287, %v255
        %v292 = vmul.f32 %v236, %v236
        %v293 = vmul.f32 %v237, %v237
        %v294 = vmul.f32 %v238, %v238
        %v295 = vmul.f32 %v239, %v239
        %v296 = vsub.f32 0.0, %v292
        %v297 = vsub.f32 0.0, %v293
        %v298 = vsub.f32 0.0, %v294
        %v299 = vsub.f32 0.0, %v295
        %v300 = vmul.f32 %v296, 1.442695
        %v301 = vpow.pop %v300
        %v302 = vmul.f32 %v297, 1.442695
        %v303 = vpow.pop %v302
        %v304 = vmul.f32 %v298, 1.442695
        %v305 = vpow.pop %v304
        %v306 = vmul.f32 %v299, 1.442695
        %v307 = vpow.pop %v306
        %v308 = vmul.f32 %v288, %v301
        %v309 = vmul.f32 %v289, %v303
        %v310 = vmul.f32 %v290, %v305
        %v311 = vmul.f32 %v291, %v307
        %v312 = vsub.f32 1.0, %v308
        %v313 = vsub.f32 1.0, %v309
        %v314 = vsub.f32 1.0, %v310
        %v315 = vsub.f32 1.0, %v311
        %vm316 = vcmp.ge.f32.partialorder %v228, 0.0
        %vm317 = vcmp.ge.f32.partialorder %v229, 0.0
        %vm318 = vcmp.ge.f32.partialorder %v230, 0.0
        %vm319 = vcmp.ge.f32.partialorder %v231, 0.0
        %v320 = vsub.f32 0.0, %v312
        %v321 = vsub.f32 0.0, %v313
        %v322 = vsub.f32 0.0, %v314
        %v323 = vsub.f32 0.0, %v315
        %v324 = vsel %vm316, %v312, %v320
        %v325 = vsel %vm317, %v313, %v321
        %v326 = vsel %vm318, %v314, %v322
        %v327 = vsel %vm319, %v315, %v323
        %v328 = vadd.f32 %v324, 1.0
        %v329 = vadd.f32 %v325, 1.0
        %v330 = vadd.f32 %v326, 1.0
        %v331 = vadd.f32 %v327, 1.0
        %v332 = vmul.f32 %v232, %v328
        %v333 = vmul.f32 %v233, %v329
        %v334 = vmul.f32 %v234, %v330
        %v335 = vmul.f32 %v235, %v331
        %v336 = vld [vmem:[#allocation2] sm:$0xff]
        %v337 = vld [vmem:[#allocation2 + $0x8] sm:$0xff]
        %v338 = vld [vmem:[#allocation2 + $0x10] sm:$0xff]
        %v339 = vld [vmem:[#allocation2 + $0x18] sm:$0xff]
        %v340 = vld [vmem:[#allocation2 + $0x20] sm:$0xff]
        %v341 = vld [vmem:[#allocation2 + $0x28] sm:$0xff]
        %v342 = vld [vmem:[#allocation2 + $0x30] sm:$0xff]
        %v343 = vld [vmem:[#allocation2 + $0x38] sm:$0xff]
        %vm344 = vcmask 523264
        %v346 = vsel %vm344, %v332, 0
        %v349 = vsel %vm344, %v333, 0
        %v352 = vsel %vm344, %v334, 0
        %v355 = vsel %vm344, %v335, 0
        %357 = vmatprep.subr.mxu0 0.0
        %358 = vmatpush1.msra.mxu0 %v336
        %359 = vmatprep.subr.mxu0 0.0
        %360 = vmatpush1.msra.mxu0 %v337
        %361 = vmatprep.subr.mxu0 0.0
        %362 = vmatpush1.msra.mxu0 %v338
        %363 = vmatprep.subr.mxu0 0.0
        %364 = vmatpush1.msra.mxu0 %v339
        %365 = vmatprep.subr.mxu0 0.0
        %366 = vmatpush1.msra.mxu0 %v340
        %367 = vmatprep.subr.mxu0 0.0
        %368 = vmatpush1.msra.mxu0 %v341
        %369 = vmatprep.subr.mxu0 0.0
        %370 = vmatpush1.msra.mxu0 %v342
        %371 = vmatprep.subr.mxu0 0.0
        %372 = vmatpush1.msra.mxu0 %v343
        %373 = vmatprep.subr.mxu0 0.0
        %374 = vmatpush1.msra.mxu0 0.0
        %375 = vmatprep.subr.mxu0 0.0
        %376 = vmatpush1.msra.mxu0 0.0
        %377 = vmatprep.subr.mxu0 0.0
        %378 = vmatpush1.msra.mxu0 0.0
        %379 = vmatprep.subr.mxu0 0.0
        %380 = vmatpush1.msra.mxu0 0.0
        %381 = vmatprep.subr.mxu0 0.0
        %382 = vmatpush1.msra.mxu0 0.0
        %383 = vmatprep.subr.mxu0 0.0
        %384 = vmatpush1.msra.mxu0 0.0
        %385 = vmatprep.subr.mxu0 0.0
        %386 = vmatpush1.msra.mxu0 0.0
        %387 = vmatprep.subr.mxu0 0.0
        %388 = vmatpush1.msra.mxu0 0.0
        %389 = vmatprep.subr.mxu0 0.0
        %390 = vmatpush1.msra.mxu0 0.0
        %391 = vmatprep.subr.mxu0 0.0
        %392 = vmatpush1.msra.mxu0 0.0
        %393 = vmatprep.subr.mxu0 0.0
        %394 = vmatpush1.msra.mxu0 0.0
        %395 = vmatprep.subr.mxu0 0.0
        %396 = vmatpush1.msra.mxu0 0.0
        %397 = vmatprep.subr.mxu0 0.0
        %398 = vmatpush1.msra.mxu0 0.0
        %399 = vmatprep.subr.mxu0 0.0
        %400 = vmatpush1.msra.mxu0 0.0
        %401 = vmatprep.subr.mxu0 0.0
        %402 = vmatpush1.msra.mxu0 0.0
        %403 = vmatprep.subr.mxu0 0.0
        %404 = vmatpush1.msra.mxu0 0.0
        %405 = vmatprep.subr.mxu0 0.0
        %406 = vmatpush1.msra.mxu0 0.0
        %407 = vmatprep.subr.mxu0 0.0
        %408 = vmatpush1.msra.mxu0 0.0
        %409 = vmatprep.subr.mxu0 0.0
        %410 = vmatpush1.msra.mxu0 0.0
        %411 = vmatprep.subr.mxu0 0.0
        %412 = vmatpush1.msra.mxu0 0.0
        %413 = vmatprep.subr.mxu0 0.0
        %414 = vmatpush1.msra.mxu0 0.0
        %415 = vmatprep.subr.mxu0 0.0
        %416 = vmatpush1.msra.mxu0 0.0
        %417 = vmatprep.subr.mxu0 0.0
        %418 = vmatpush1.msra.mxu0 0.0
        %419 = vmatprep.subr.mxu0 0.0
        %420 = vmatpush1.msra.mxu0 0.0
        %421 = vmatprep.mubr.f32.mxu0 0.0
        %422 = vmatmul.mubr.f32.gmra.mrb[0].mxu0 %v346
        %v423 = vpop.f32.mrb[0].mxu0
        %v424 = vadd.f32 0.0, %v423
        %v425 = vpop.f32.mrb[0].mxu0
        %426 = vmatprep.mubr.f32.mxu0 0.0
        %427 = vmatmul.mubr.f32.gmra.mrb[0].mxu0 %v349
        %v428 = vpop.f32.mrb[0].mxu0
        %v429 = vadd.f32 0.0, %v428
        %v430 = vpop.f32.mrb[0].mxu0
        %431 = vmatprep.mubr.f32.mxu0 0.0
        %432 = vmatmul.mubr.f32.gmra.mrb[0].mxu0 %v352
        %v433 = vpop.f32.mrb[0].mxu0
        %v434 = vadd.f32 0.0, %v433
        %v435 = vpop.f32.mrb[0].mxu0
        %436 = vmatprep.mubr.f32.mxu0 0.0
        %437 = vmatmul.mubr.f32.gmra.mrb[0].mxu0 %v355
        %v438 = vpop.f32.mrb[0].mxu0
        %v439 = vadd.f32 0.0, %v438
        %v440 = vpop.f32.mrb[0].mxu0
        %441 = vdwg.mxu0
        %442 = vst.msk [vmem:[%s207] sm:$0xff] %vm344, %v424
        %443 = vst.msk [vmem:[%s207 + $0x8] sm:$0xff] %vm344, %v429
        %444 = vst.msk [vmem:[%s207 + $0x10] sm:$0xff] %vm344, %v434
        %445 = vst.msk [vmem:[%s207 + $0x18] sm:$0xff] %vm344, %v439
        %v446 = vld [vmem:[%s2] sm:$0xff]
        %v447 = vld [vmem:[%s2 + $0x8] sm:$0xff]
        %v448 = vld [vmem:[%s2 + $0x10] sm:$0xff]
        %v449 = vld [vmem:[%s2 + $0x18] sm:$0xff]
        %v450 = vld [vmem:[%s2 + $0x20] sm:$0xff]
        %v451 = vld [vmem:[%s2 + $0x28] sm:$0xff]
        %v452 = vld [vmem:[%s2 + $0x30] sm:$0xff]
        %v453 = vld [vmem:[%s2 + $0x38] sm:$0xff]
        %v455 = vsel %vm344, %v424, 0
        %v458 = vsel %vm344, %v429, 0
        %v461 = vsel %vm344, %v434, 0
        %v464 = vsel %vm344, %v439, 0
        %466 = vmatprep.subr.mxu0 0.0
        %467 = vmatpush1.msra.mxu0 %v446
        %468 = vmatprep.subr.mxu0 0.0
        %469 = vmatpush1.msra.mxu0 %v447
        %470 = vmatprep.subr.mxu0 0.0
        %471 = vmatpush1.msra.mxu0 %v448
        %472 = vmatprep.subr.mxu0 0.0
        %473 = vmatpush1.msra.mxu0 %v449
        %474 = vmatprep.subr.mxu0 0.0
        %475 = vmatpush1.msra.mxu0 %v450
        %476 = vmatprep.subr.mxu0 0.0
        %477 = vmatpush1.msra.mxu0 %v451
        %478 = vmatprep.subr.mxu0 0.0
        %479 = vmatpush1.msra.mxu0 %v452
        %480 = vmatprep.subr.mxu0 0.0
        %481 = vmatpush1.msra.mxu0 %v453
        %482 = vmatprep.subr.mxu0 0.0
        %483 = vmatpush1.msra.mxu0 0.0
        %484 = vmatprep.subr.mxu0 0.0
        %485 = vmatpush1.msra.mxu0 0.0
        %486 = vmatprep.subr.mxu0 0.0
        %487 = vmatpush1.msra.mxu0 0.0
        %488 = vmatprep.subr.mxu0 0.0
        %489 = vmatpush1.msra.mxu0 0.0
        %490 = vmatprep.subr.mxu0 0.0
        %491 = vmatpush1.msra.mxu0 0.0
        %492 = vmatprep.subr.mxu0 0.0
        %493 = vmatpush1.msra.mxu0 0.0
        %494 = vmatprep.subr.mxu0 0.0
        %495 = vmatpush1.msra.mxu0 0.0
        %496 = vmatprep.subr.mxu0 0.0
        %497 = vmatpush1.msra.mxu0 0.0
        %498 = vmatprep.subr.mxu0 0.0
        %499 = vmatpush1.msra.mxu0 0.0
        %500 = vmatprep.subr.mxu0 0.0
        %501 = vmatpush1.msra.mxu0 0.0
        %502 = vmatprep.subr.mxu0 0.0
        %503 = vmatpush1.msra.mxu0 0.0
        %504 = vmatprep.subr.mxu0 0.0
        %505 = vmatpush1.msra.mxu0 0.0
        %506 = vmatprep.subr.mxu0 0.0
        %507 = vmatpush1.msra.mxu0 0.0
        %508 = vmatprep.subr.mxu0 0.0
        %509 = vmatpush1.msra.mxu0 0.0
        %510 = vmatprep.subr.mxu0 0.0
        %511 = vmatpush1.msra.mxu0 0.0
        %512 = vmatprep.subr.mxu0 0.0
        %513 = vmatpush1.msra.mxu0 0.0
        %514 = vmatprep.subr.mxu0 0.0
        %515 = vmatpush1.msra.mxu0 0.0
        %516 = vmatprep.subr.mxu0 0.0
        %517 = vmatpush1.msra.mxu0 0.0
        %518 = vmatprep.subr.mxu0 0.0
        %519 = vmatpush1.msra.mxu0 0.0
        %520 = vmatprep.subr.mxu0 0.0
        %521 = vmatpush1.msra.mxu0 0.0
        %522 = vmatprep.subr.mxu0 0.0
        %523 = vmatpush1.msra.mxu0 0.0
        %524 = vmatprep.subr.mxu0 0.0
        %525 = vmatpush1.msra.mxu0 0.0
        %526 = vmatprep.subr.mxu0 0.0
        %527 = vmatpush1.msra.mxu0 0.0
        %528 = vmatprep.subr.mxu0 0.0
        %529 = vmatpush1.msra.mxu0 0.0
        %530 = vmatprep.mubr.f32.mxu0 0.0
        %531 = vmatmul.mubr.f32.gmra.mrb[0].mxu0 %v455
        %v532 = vpop.f32.mrb[0].mxu0
        %v533 = vadd.f32 0.0, %v532
        %v534 = vpop.f32.mrb[0].mxu0
        %535 = vmatprep.mubr.f32.mxu0 0.0
        %536 = vmatmul.mubr.f32.gmra.mrb[0].mxu0 %v458
        %v537 = vpop.f32.mrb[0].mxu0
        %v538 = vadd.f32 0.0, %v537
        %v539 = vpop.f32.mrb[0].mxu0
        %540 = vmatprep.mubr.f32.mxu0 0.0
        %541 = vmatmul.mubr.f32.gmra.mrb[0].mxu0 %v461
        %v542 = vpop.f32.mrb[0].mxu0
        %v543 = vadd.f32 0.0, %v542
        %v544 = vpop.f32.mrb[0].mxu0
        %545 = vmatprep.mubr.f32.mxu0 0.0
        %546 = vmatmul.mubr.f32.gmra.mrb[0].mxu0 %v464
        %v547 = vpop.f32.mrb[0].mxu0
        %v548 = vadd.f32 0.0, %v547
        %v549 = vpop.f32.mrb[0].mxu0
        %550 = vdwg.mxu0
        %vm551 = vcmask 39936
        %552 = vst.msk [vmem:[%s226] sm:$0xff] %vm551, %v533
        %553 = vst.msk [vmem:[%s226 + $0x8] sm:$0xff] %vm551, %v538
        %554 = vst.msk [vmem:[%s226 + $0x10] sm:$0xff] %vm551, %v543
        %555 = vst.msk [vmem:[%s226 + $0x18] sm:$0xff] %vm551, %v548
        %s556 = sand.u32 %s96, 1
        %s557 = scalar_lea.sflag [#allocation4], %s556
        %s558 = sand.u32 %s96, 1
        %s559 = smul.addr %s558, 32
        %s560 = scalar_lea.vmem [#allocation5], %s559
        %s561 = smul.u32 4, %s20
        %p562 = scmp.lt.s32.totalorder %s561, 7
        %s563 = scalar_select %p562, %s561, 7
        %s564 = smul.addr %s563, 8
        %s565 = scalar_lea.vmem %s4, %s564
        // Predicated region
        $region37: #{tpu_custom_call.1} parent=31 // pred_check
          %p566 = pneg %p106
        $region38: #{tpu_custom_call.1} parent=31 // pred_check_branch
          %568 = sbr.rel (%p566) target = $region40
        $region39: #{tpu_custom_call.1} parent=31 // pred_region
          %s569 = smul.u32 4, %s20
          %s571 = ssub.s32 512, 512
          %572 = vsyncadd %s557, %s571
          %s573 = smul.addr %s569, 128
          %s574 = scalar_lea.hbm %s3, %s573
          %s575 = sshll.u32 %s560, 4
          %s576 = int_to_ptr.vmem [resolvable:$true] %s575
          %581 = dma.vmem_to_hbm [thread:$0]  %s576, 512, %s574, %s557, 128, 128, 8
        $region40: #{tpu_custom_call.1} parent=31 // pred_fallthru
          _
        // Predicated region
        $region41: #{tpu_custom_call.1} parent=31 // pred_check
          %p582 = pneg %p132
        $region42: #{tpu_custom_call.1} parent=31 // pred_check_branch
          %584 = sbr.rel (%p582) target = $region44
        $region43: #{tpu_custom_call.1} parent=31 // pred_region
          %s585 = smul.u32 4, %s20
        $region44: #{tpu_custom_call.1} parent=31 // pred_fallthru
          _
      $region32: #{tpu_custom_call.1} parent=5 // pred_fallthru
        _
      %p586 = scmp.le.s32.totalorder 2, %s15
      // Predicated region
      $region45: #{tpu_custom_call.1} parent=5 // pred_check
        %p587 = pneg %p586
      $region46: #{tpu_custom_call.1} parent=5 // pred_check_branch
        %589 = sbr.rel (%p587) target = $region48
      $region47: #{tpu_custom_call.1} parent=5 // pred_region
        %s590 = ssub.s32 %s15, 2
        // Predicated region
        $region49: #{tpu_custom_call.1} parent=47 // pred_check
          %p591 = pneg %p112
        $region50: #{tpu_custom_call.1} parent=47 // pred_check_branch
          %593 = sbr.rel (%p591) target = $region52
        $region51: #{tpu_custom_call.1} parent=47 // pred_region
          %s594 = sand.u32 %s97, 1
          %s595 = scalar_lea.sflag [#allocation4], %s594
          %s596 = sand.u32 %s97, 1
          %s597 = smul.addr %s596, 32
          %s598 = scalar_lea.vmem [#allocation5], %s597
          %599 = dma.done %s595, 512
        $region52: #{tpu_custom_call.1} parent=47 // pred_fallthru
          _
        // Predicated region
        $region53: #{tpu_custom_call.1} parent=47 // pred_check
          %p600 = pneg %p138
        $region54: #{tpu_custom_call.1} parent=47 // pred_check_branch
          %602 = sbr.rel (%p600) target = $region56
        $region55: #{tpu_custom_call.1} parent=47 // pred_region
          %s603 = smul.u32 4, %s21
          %p604 = scmp.lt.s32.totalorder %s603, 7
          %s605 = scalar_select %p604, %s603, 7
          %s606 = smul.addr %s605, 8
          %s607 = scalar_lea.vmem %s4, %s606
        $region56: #{tpu_custom_call.1} parent=47 // pred_fallthru
          _
      $region48: #{tpu_custom_call.1} parent=5 // pred_fallthru
        _
    $region6: #{tpu_custom_call.1} parent=1 // loop_footer
      %s19 = sadd.s32 1, %s15
    $region7: #{tpu_custom_call.1} parent=1 // loop_footer_branch
      %14 = sbr.rel target = $region3
    $region8: #{tpu_custom_call.1} parent=1 // loop_exit
      _
    %608 = vsyncpa [#allocation3], 1
    %s609 = scalar_lea.sflag [#allocation3], 1
    %610 = vsyncpa %s609, 1
    %611 = vsyncpa [#allocation4], 1
    %s612 = scalar_lea.sflag [#allocation4], 1
    %613 = vsyncpa %s612, 1

</llo_original>
